<compile_context>
chip_gen: v6e
topology: v6e:2x2x1
jax: 0.10.0
libtpu: 0.0.40
codegen_flags: <defaults>
</compile_context>

<pallas_src>
import jax
import jax.numpy as jnp
from jax import lax
from jax.experimental import pallas as pl
from jax.experimental.pallas import tpu as pltpu


def pa_kernel(x_ref, w_ref, b_ref, o_ref):
    """One (batch, channel) plane per grid step.

    x_ref : (H, W)  VMEM  - input plane (N and C block dims squeezed)
    w_ref : (C*9,)  SMEM  - flattened depthwise 3x3 taps, row-major per channel
    b_ref : (C,)    SMEM  - conv bias
    o_ref : (H, W)  VMEM  - output plane
    """
    c = pl.program_id(1)
    H, W = x_ref.shape

    x = x_ref[...].astype(jnp.float32)        # W on lanes, H on sublanes

    # Border-validity masks implementing the conv's zero padding.
    row = lax.broadcasted_iota(jnp.int32, (H, W), 0)
    col = lax.broadcasted_iota(jnp.int32, (H, W), 1)
    row_ge1 = row >= 1          # valid when sampling h-1
    row_le  = row <= H - 2      # valid when sampling h+1
    col_ge1 = col >= 1          # valid when sampling w-1
    col_le  = col <= W - 2      # valid when sampling w+1

    acc = jnp.zeros((H, W), jnp.float32)
    for oh in (-1, 0, 1):
        for ow in (-1, 0, 1):
            # tap = weight[c, 0, oh+1, ow+1]  (scalar read from SMEM)
            tap = w_ref[c * 9 + (oh + 1) * 3 + (ow + 1)]

            shifted = x
            mask = None
            if oh != 0:
                # shifted[h, w] = x[h + oh, w]   (sublane rotate, XLU)
                shifted = pltpu.roll(shifted, shift=(-oh) % H, axis=0)
                mask = row_ge1 if oh == -1 else row_le
            if ow != 0:
                # shifted[h, w] = x[h, w + ow]   (lane rotate, XLU)
                shifted = pltpu.roll(shifted, shift=(-ow) % W, axis=1)
                m = col_ge1 if ow == -1 else col_le
                mask = m if mask is None else (mask & m)
            if mask is not None:
                shifted = jnp.where(mask, shifted, 0.0)   # zero padding

            acc = acc + shifted * tap
    acc = acc + b_ref[c]

    # Pixel attention gate: x * sigmoid(conv(x))
    o_ref[...] = (x * jax.nn.sigmoid(acc)).astype(o_ref.dtype)


def pa_forward(x_nchw, w_oihw, bias):
    """x_nchw: (N, C, H, W); w_oihw: (C, 1, 3, 3) depthwise weights; bias: (C,)."""
    N, C, H, W = x_nchw.shape

    w_flat = w_oihw.reshape(C * 9).astype(jnp.float32)   # [c*9 + kh*3 + kw]
    b_flat = bias.reshape(C).astype(jnp.float32)

    plane_spec = pl.BlockSpec((None, None, H, W), lambda n, c: (n, c, 0, 0))

    return pl.pallas_call(
        pa_kernel,
        out_shape=jax.ShapeDtypeStruct((N, C, H, W), x_nchw.dtype),
        grid_spec=pltpu.PrefetchScalarGridSpec(
            num_scalar_prefetch=0,
            grid=(N, C),
            in_specs=[
                plane_spec,
                pl.BlockSpec(memory_space=pltpu.MemorySpace.SMEM),
                pl.BlockSpec(memory_space=pltpu.MemorySpace.SMEM),
            ],
            out_specs=plane_spec,
        ),
        compiler_params=pltpu.CompilerParams(
            dimension_semantics=("parallel", "parallel")),
    )(x_nchw, w_flat, b_flat)


def pa_reference(x_nchw, w_oihw, bias):
    """Pure-JAX reference (lax depthwise conv, NCHW) for correctness check."""
    C = x_nchw.shape[1]
    conv = lax.conv_general_dilated(
        x_nchw, w_oihw,
        window_strides=(1, 1),
        padding=((1, 1), (1, 1)),
        dimension_numbers=("NCHW", "OIHW", "NCHW"),
        feature_group_count=C,
    ) + bias.reshape(1, C, 1, 1)
    return x_nchw * jax.nn.sigmoid(conv)


if __name__ == "__main__":
    # Small shapes consistent with the module: dim (=channels) = 4.
    N, C, H, W = 2, 4, 16, 16

    key = jax.random.PRNGKey(0)
    kx, kw, kb = jax.random.split(key, 3)

    x = jax.random.normal(kx, (N, C, H, W), dtype=jnp.float32)
    # nn.Conv2d(dim, dim, 3, padding=1, groups=dim) -> weight (dim,1,3,3), bias (dim,)
    w = jax.random.normal(kw, (C, 1, 3, 3), dtype=jnp.float32) * 0.1
    b = jax.random.normal(kb, (C,), dtype=jnp.float32) * 0.1

    out = jax.block_until_ready(pa_forward(x, w, b))
    ref = jax.block_until_ready(pa_reference(x, w, b))

    assert out.shape == (N, C, H, W)
    assert jnp.allclose(out, ref, atol=1e-5, rtol=1e-5)

    print("KERNEL_OK")
</pallas_src>

<mosaic_0001>
module attributes {stable_mosaic.version = 11 : i64} {
  func.func @pa_kernel(%arg0: i32, %arg1: i32, %arg2: memref<1x1x16x16xf32, #tpu.memory_space<vmem>>, %arg3: memref<36xf32, #tpu.memory_space<smem>>, %arg4: memref<4xf32, #tpu.memory_space<smem>>, %arg5: memref<1x1x16x16xf32, #tpu.memory_space<vmem>>) attributes {dimension_semantics = [#tpu.dimension_semantics<parallel>, #tpu.dimension_semantics<parallel>], iteration_bounds = array<i64: 2, 4>, scalar_prefetch = 0 : i64, scratch_operands = 0 : i64, tpu.core_type = #tpu.core_type<tc>, window_params = [{transform_indices = @transform_0, window_bounds = array<i64: 1, 1, 16, 16>}, {transform_indices = @transform_1, window_bounds = array<i64: 36>}, {transform_indices = @transform_2, window_bounds = array<i64: 4>}, {transform_indices = @transform_3, window_bounds = array<i64: 1, 1, 16, 16>}]} {
    %c0 = arith.constant 0 : index
    %c0_0 = arith.constant 0 : index
    %c0_1 = arith.constant 0 : index
    %c0_2 = arith.constant 0 : index
    %0 = vector.load %arg2[%c0, %c0_0, %c0_1, %c0_2] : memref<1x1x16x16xf32, #tpu.memory_space<vmem>>, vector<1x1x16x16xf32>
    %1 = vector.shape_cast %0 : vector<1x1x16x16xf32> to vector<16x16xf32>
    %2 = tpu.iota {dimensions = array<i32: 0>} : vector<16x16xi32>
    %3 = tpu.iota {dimensions = array<i32: 1>} : vector<16x16xi32>
    %c1_i32 = arith.constant 1 : i32
    %4 = vector.broadcast %c1_i32 : i32 to vector<16x16xi32>
    %5 = arith.cmpi sge, %2, %4 : vector<16x16xi32>
    %c14_i32 = arith.constant 14 : i32
    %6 = vector.broadcast %c14_i32 : i32 to vector<16x16xi32>
    %7 = arith.cmpi sle, %2, %6 : vector<16x16xi32>
    %c1_i32_3 = arith.constant 1 : i32
    %8 = vector.broadcast %c1_i32_3 : i32 to vector<16x16xi32>
    %9 = arith.cmpi sge, %3, %8 : vector<16x16xi32>
    %c14_i32_4 = arith.constant 14 : i32
    %10 = vector.broadcast %c14_i32_4 : i32 to vector<16x16xi32>
    %11 = arith.cmpi sle, %3, %10 : vector<16x16xi32>
    %cst = arith.constant 0.000000e+00 : f32
    %12 = vector.broadcast %cst : f32 to vector<16x16xf32>
    %c9_i32 = arith.constant 9 : i32
    %13 = arith.muli %arg1, %c9_i32 : i32
    %c0_i32 = arith.constant 0 : i32
    %14 = arith.addi %13, %c0_i32 : i32
    %c0_i32_5 = arith.constant 0 : i32
    %15 = arith.addi %14, %c0_i32_5 : i32
    %16 = arith.index_cast %15 : i32 to index
    %17 = memref.load %arg3[%16] : memref<36xf32, #tpu.memory_space<smem>>
    %c1_i32_6 = arith.constant 1 : i32
    %18 = tpu.dynamic_rotate %1 by %c1_i32_6 dim 0 : vector<16x16xf32>, i32 -> vector<16x16xf32>
    %c1_i32_7 = arith.constant 1 : i32
    %19 = tpu.dynamic_rotate %18 by %c1_i32_7 dim 1 : vector<16x16xf32>, i32 -> vector<16x16xf32>
    %20 = arith.andi %5, %9 : vector<16x16xi1>
    %cst_8 = arith.constant 0.000000e+00 : f32
    %21 = vector.broadcast %cst_8 : f32 to vector<16x16xf32>
    %22 = arith.select %20, %19, %21 : vector<16x16xi1>, vector<16x16xf32>
    %23 = vector.broadcast %17 : f32 to vector<16x16xf32>
    %24 = arith.mulf %22, %23 : vector<16x16xf32>
    %25 = arith.addf %12, %24 : vector<16x16xf32>
    %c9_i32_9 = arith.constant 9 : i32
    %26 = arith.muli %arg1, %c9_i32_9 : i32
    %c0_i32_10 = arith.constant 0 : i32
    %27 = arith.addi %26, %c0_i32_10 : i32
    %c1_i32_11 = arith.constant 1 : i32
    %28 = arith.addi %27, %c1_i32_11 : i32
    %29 = arith.index_cast %28 : i32 to index
    %30 = memref.load %arg3[%29] : memref<36xf32, #tpu.memory_space<smem>>
    %c1_i32_12 = arith.constant 1 : i32
    %31 = tpu.dynamic_rotate %1 by %c1_i32_12 dim 0 : vector<16x16xf32>, i32 -> vector<16x16xf32>
    %cst_13 = arith.constant 0.000000e+00 : f32
    %32 = vector.broadcast %cst_13 : f32 to vector<16x16xf32>
    %33 = arith.select %5, %31, %32 : vector<16x16xi1>, vector<16x16xf32>
    %34 = vector.broadcast %30 : f32 to vector<16x16xf32>
    %35 = arith.mulf %33, %34 : vector<16x16xf32>
    %36 = arith.addf %25, %35 : vector<16x16xf32>
    %c9_i32_14 = arith.constant 9 : i32
    %37 = arith.muli %arg1, %c9_i32_14 : i32
    %c0_i32_15 = arith.constant 0 : i32
    %38 = arith.addi %37, %c0_i32_15 : i32
    %c2_i32 = arith.constant 2 : i32
    %39 = arith.addi %38, %c2_i32 : i32
    %40 = arith.index_cast %39 : i32 to index
    %41 = memref.load %arg3[%40] : memref<36xf32, #tpu.memory_space<smem>>
    %c1_i32_16 = arith.constant 1 : i32
    %42 = tpu.dynamic_rotate %1 by %c1_i32_16 dim 0 : vector<16x16xf32>, i32 -> vector<16x16xf32>
    %c15_i32 = arith.constant 15 : i32
    %43 = tpu.dynamic_rotate %42 by %c15_i32 dim 1 : vector<16x16xf32>, i32 -> vector<16x16xf32>
    %44 = arith.andi %5, %11 : vector<16x16xi1>
    %cst_17 = arith.constant 0.000000e+00 : f32
    %45 = vector.broadcast %cst_17 : f32 to vector<16x16xf32>
    %46 = arith.select %44, %43, %45 : vector<16x16xi1>, vector<16x16xf32>
    %47 = vector.broadcast %41 : f32 to vector<16x16xf32>
    %48 = arith.mulf %46, %47 : vector<16x16xf32>
    %49 = arith.addf %36, %48 : vector<16x16xf32>
    %c9_i32_18 = arith.constant 9 : i32
    %50 = arith.muli %arg1, %c9_i32_18 : i32
    %c3_i32 = arith.constant 3 : i32
    %51 = arith.addi %50, %c3_i32 : i32
    %c0_i32_19 = arith.constant 0 : i32
    %52 = arith.addi %51, %c0_i32_19 : i32
    %53 = arith.index_cast %52 : i32 to index
    %54 = memref.load %arg3[%53] : memref<36xf32, #tpu.memory_space<smem>>
    %c1_i32_20 = arith.constant 1 : i32
    %55 = tpu.dynamic_rotate %1 by %c1_i32_20 dim 1 : vector<16x16xf32>, i32 -> vector<16x16xf32>
    %cst_21 = arith.constant 0.000000e+00 : f32
    %56 = vector.broadcast %cst_21 : f32 to vector<16x16xf32>
    %57 = arith.select %9, %55, %56 : vector<16x16xi1>, vector<16x16xf32>
    %58 = vector.broadcast %54 : f32 to vector<16x16xf32>
    %59 = arith.mulf %57, %58 : vector<16x16xf32>
    %60 = arith.addf %49, %59 : vector<16x16xf32>
    %c9_i32_22 = arith.constant 9 : i32
    %61 = arith.muli %arg1, %c9_i32_22 : i32
    %c3_i32_23 = arith.constant 3 : i32
    %62 = arith.addi %61, %c3_i32_23 : i32
    %c1_i32_24 = arith.constant 1 : i32
    %63 = arith.addi %62, %c1_i32_24 : i32
    %64 = arith.index_cast %63 : i32 to index
    %65 = memref.load %arg3[%64] : memref<36xf32, #tpu.memory_space<smem>>
    %66 = vector.broadcast %65 : f32 to vector<16x16xf32>
    %67 = arith.mulf %1, %66 : vector<16x16xf32>
    %68 = arith.addf %60, %67 : vector<16x16xf32>
    %c9_i32_25 = arith.constant 9 : i32
    %69 = arith.muli %arg1, %c9_i32_25 : i32
    %c3_i32_26 = arith.constant 3 : i32
    %70 = arith.addi %69, %c3_i32_26 : i32
    %c2_i32_27 = arith.constant 2 : i32
    %71 = arith.addi %70, %c2_i32_27 : i32
    %72 = arith.index_cast %71 : i32 to index
    %73 = memref.load %arg3[%72] : memref<36xf32, #tpu.memory_space<smem>>
    %c15_i32_28 = arith.constant 15 : i32
    %74 = tpu.dynamic_rotate %1 by %c15_i32_28 dim 1 : vector<16x16xf32>, i32 -> vector<16x16xf32>
    %cst_29 = arith.constant 0.000000e+00 : f32
    %75 = vector.broadcast %cst_29 : f32 to vector<16x16xf32>
    %76 = arith.select %11, %74, %75 : vector<16x16xi1>, vector<16x16xf32>
    %77 = vector.broadcast %73 : f32 to vector<16x16xf32>
    %78 = arith.mulf %76, %77 : vector<16x16xf32>
    %79 = arith.addf %68, %78 : vector<16x16xf32>
    %c9_i32_30 = arith.constant 9 : i32
    %80 = arith.muli %arg1, %c9_i32_30 : i32
    %c6_i32 = arith.constant 6 : i32
    %81 = arith.addi %80, %c6_i32 : i32
    %c0_i32_31 = arith.constant 0 : i32
    %82 = arith.addi %81, %c0_i32_31 : i32
    %83 = arith.index_cast %82 : i32 to index
    %84 = memref.load %arg3[%83] : memref<36xf32, #tpu.memory_space<smem>>
    %c15_i32_32 = arith.constant 15 : i32
    %85 = tpu.dynamic_rotate %1 by %c15_i32_32 dim 0 : vector<16x16xf32>, i32 -> vector<16x16xf32>
    %c1_i32_33 = arith.constant 1 : i32
    %86 = tpu.dynamic_rotate %85 by %c1_i32_33 dim 1 : vector<16x16xf32>, i32 -> vector<16x16xf32>
    %87 = arith.andi %7, %9 : vector<16x16xi1>
    %cst_34 = arith.constant 0.000000e+00 : f32
    %88 = vector.broadcast %cst_34 : f32 to vector<16x16xf32>
    %89 = arith.select %87, %86, %88 : vector<16x16xi1>, vector<16x16xf32>
    %90 = vector.broadcast %84 : f32 to vector<16x16xf32>
    %91 = arith.mulf %89, %90 : vector<16x16xf32>
    %92 = arith.addf %79, %91 : vector<16x16xf32>
    %c9_i32_35 = arith.constant 9 : i32
    %93 = arith.muli %arg1, %c9_i32_35 : i32
    %c6_i32_36 = arith.constant 6 : i32
    %94 = arith.addi %93, %c6_i32_36 : i32
    %c1_i32_37 = arith.constant 1 : i32
    %95 = arith.addi %94, %c1_i32_37 : i32
    %96 = arith.index_cast %95 : i32 to index
    %97 = memref.load %arg3[%96] : memref<36xf32, #tpu.memory_space<smem>>
    %c15_i32_38 = arith.constant 15 : i32
    %98 = tpu.dynamic_rotate %1 by %c15_i32_38 dim 0 : vector<16x16xf32>, i32 -> vector<16x16xf32>
    %cst_39 = arith.constant 0.000000e+00 : f32
    %99 = vector.broadcast %cst_39 : f32 to vector<16x16xf32>
    %100 = arith.select %7, %98, %99 : vector<16x16xi1>, vector<16x16xf32>
    %101 = vector.broadcast %97 : f32 to vector<16x16xf32>
    %102 = arith.mulf %100, %101 : vector<16x16xf32>
    %103 = arith.addf %92, %102 : vector<16x16xf32>
    %c9_i32_40 = arith.constant 9 : i32
    %104 = arith.muli %arg1, %c9_i32_40 : i32
    %c6_i32_41 = arith.constant 6 : i32
    %105 = arith.addi %104, %c6_i32_41 : i32
    %c2_i32_42 = arith.constant 2 : i32
    %106 = arith.addi %105, %c2_i32_42 : i32
    %107 = arith.index_cast %106 : i32 to index
    %108 = memref.load %arg3[%107] : memref<36xf32, #tpu.memory_space<smem>>
    %c15_i32_43 = arith.constant 15 : i32
    %109 = tpu.dynamic_rotate %1 by %c15_i32_43 dim 0 : vector<16x16xf32>, i32 -> vector<16x16xf32>
    %c15_i32_44 = arith.constant 15 : i32
    %110 = tpu.dynamic_rotate %109 by %c15_i32_44 dim 1 : vector<16x16xf32>, i32 -> vector<16x16xf32>
    %111 = arith.andi %7, %11 : vector<16x16xi1>
    %cst_45 = arith.constant 0.000000e+00 : f32
    %112 = vector.broadcast %cst_45 : f32 to vector<16x16xf32>
    %113 = arith.select %111, %110, %112 : vector<16x16xi1>, vector<16x16xf32>
    %114 = vector.broadcast %108 : f32 to vector<16x16xf32>
    %115 = arith.mulf %113, %114 : vector<16x16xf32>
    %116 = arith.addf %103, %115 : vector<16x16xf32>
    %117 = arith.index_cast %arg1 : i32 to index
    %118 = memref.load %arg4[%117] : memref<4xf32, #tpu.memory_space<smem>>
    %119 = vector.broadcast %118 : f32 to vector<16x16xf32>
    %120 = arith.addf %116, %119 : vector<16x16xf32>
    %121 = arith.negf %120 : vector<16x16xf32>
    %122 = math.exp %121 : vector<16x16xf32>
    %cst_46 = arith.constant 1.000000e+00 : f32
    %123 = vector.broadcast %cst_46 : f32 to vector<16x16xf32>
    %124 = arith.addf %123, %122 : vector<16x16xf32>
    %125 = arith.divf %123, %124 : vector<16x16xf32>
    %126 = arith.mulf %1, %125 : vector<16x16xf32>
    %c0_47 = arith.constant 0 : index
    %c0_48 = arith.constant 0 : index
    %c0_49 = arith.constant 0 : index
    %c0_50 = arith.constant 0 : index
    %127 = vector.load %arg5[%c0_47, %c0_48, %c0_49, %c0_50] : memref<1x1x16x16xf32, #tpu.memory_space<vmem>>, vector<1x1x16x16xf32>
    %128 = vector.shape_cast %127 : vector<1x1x16x16xf32> to vector<16x16xf32>
    %129 = vector.shape_cast %126 : vector<16x16xf32> to vector<1x1x16x16xf32>
    tpu.vector_store %arg5[%c0_47, %c0_48, %c0_49, %c0_50], %129 {strides = array<i32>} : memref<1x1x16x16xf32, #tpu.memory_space<vmem>>, vector<1x1x16x16xf32>,
    return
  }
  func.func @transform_0(%arg0: i32, %arg1: i32) -> (i32, i32, i32, i32) {
    %c0_i32 = arith.constant 0 : i32
    %c0_i32_0 = arith.constant 0 : i32
    %c0_i32_1 = arith.constant 0 : i32
    return %arg0, %arg1, %c0_i32, %c0_i32_0 : i32, i32, i32, i32
  }
  func.func @transform_1(%arg0: i32, %arg1: i32) -> i32 {
    %c0_i32 = arith.constant 0 : i32
    %c0_i32_0 = arith.constant 0 : i32
    return %c0_i32 : i32
  }
  func.func @transform_2(%arg0: i32, %arg1: i32) -> i32 {
    %c0_i32 = arith.constant 0 : i32
    %c0_i32_0 = arith.constant 0 : i32
    return %c0_i32 : i32
  }
  func.func @transform_3(%arg0: i32, %arg1: i32) -> (i32, i32, i32, i32) {
    %c0_i32 = arith.constant 0 : i32
    %c0_i32_0 = arith.constant 0 : i32
    %c0_i32_1 = arith.constant 0 : i32
    return %arg0, %arg1, %c0_i32, %c0_i32_0 : i32, i32, i32, i32
  }
}

</mosaic_0001>

<llo_original>
// kernel: tpu_custom_call.1
$region0: #{tpu_custom_call.1}
  #allocation0 [shape = 'u32[]', space=smem, size = 0x4, offset = 0x4, fixed_abs, tag = 'smem constant byte address 0x4 - core index']
  #allocation1 [shape = 'u32[144,128]{1,0:T(1,128)}', space=vmem, size = 0x12000, scoped, tag = 'internal scratch']
  %s0 = inlined_call_operand.hbm [shape: f32[2,4,16,16], index: 0, kind: input, shape index: {}]
  %s1 = inlined_call_operand.vmem [shape: f32[36], index: 1, kind: input, shape index: {}]
  %s2 = inlined_call_operand.vmem [shape: f32[4], index: 2, kind: input, shape index: {}]
  %s3 = inlined_call_operand.hbm [shape: f32[2,4,16,16], index: 3, kind: output, shape index: {}]
  %s4 = sld [smem:[#allocation0]]
  $region57: #{tpu_custom_call.1} parent=0
    _
  %s6 = ssub.s32 1, %s4
  %s7 = scalar_select 0, %s6, %s4
  $region1: #{tpu_custom_call.1} parent=0
    #allocation2 [shape = 'u8[16384]{0}', space=vmem, size = 0x4000, scoped, tag = 'input window, operand 0']
    #allocation3 [shape = 's32[2]{0}', space=sflag, size = 0x8, scoped, tag = 'scoped memory for tpu_custom_call.1']
    #allocation4 [shape = 's32[2]{0}', space=sflag, size = 0x8, scoped, tag = 'scoped memory for tpu_custom_call.1']
    #allocation5 [shape = 's32[2]{0}', space=sflag, size = 0x8, scoped, tag = 'scoped memory for tpu_custom_call.1']
    #allocation6 [shape = 'u8[512]{0}', space=smem, size = 0x200, scoped, tag = 'input window, operand 1, single buffered']
    #allocation7 [shape = 'u8[512]{0}', space=smem, size = 0x200, scoped, tag = 'input window, operand 2, single buffered']
    #allocation8 [shape = 's32[1]{0}', space=sflag, size = 0x4, scoped, tag = 'scoped memory for tpu_custom_call.1']
    #allocation9 [shape = 'u8[16384]{0}', space=vmem, size = 0x4000, scoped, tag = 'output window, operand 0']
    %8 = vsyncpa [#allocation3], 0
    %s9 = scalar_lea.sflag [#allocation3], 1
    %10 = vsyncpa %s9, 0
    %11 = vsyncpa [#allocation5], 0
    %12 = vsyncpa [#allocation8], 0
    %13 = vsyncpa [#allocation4], 0
    %s14 = scalar_lea.sflag [#allocation4], 1
    %15 = vsyncpa %s14, 0
    loop: start=0, step=1, limit=10
    $region2: #{tpu_custom_call.1} parent=1 // loop_pre_header
      _
    $region3: #{tpu_custom_call.1} parent=1 // loop_header
      %s17 = sphi 0, %s21
      %p18 = scmp.ge.s32.totalorder %s17, 10
      %s24 = sphi 0, %s36
      %s25 = sphi 0, %s32
      %s26 = sphi 0, %s24
      %s27 = sphi 0, %s25
      %s28 = sphi 0, %s26
      %s29 = sphi 0, %s27
      %s41 = sphi 0, %s43
      %s44 = sphi 0, %s41
      %s45 = sphi 0, %s44
      %s61 = sphi 0, %s45
      %s65 = sphi 0, %s65
      %s67 = sphi 0, %s65
      %s68 = sphi 0, %s67
      %s82 = sphi 0, %s68
      %s86 = sphi 0, %s86
      %s88 = sphi 0, %s86
      %s89 = sphi 0, %s88
      %s103 = sphi 0, %s89
      %s111 = sphi 0, %s113
      %s114 = sphi 0, %s111
      %s115 = sphi 0, %s114
      %s131 = sphi 0, %s115
    $region4: #{tpu_custom_call.1} parent=1 // loop_header_branch
      %20 = sbr.rel (%p18) target = $region8
    $region5: #{tpu_custom_call.1} parent=1 // loop_body
      %s22 = ssub.s32 %s17, 1
      %s23 = ssub.s32 %s17, 2
      %s30 = sadd.s32 1, %s25
      %p31 = scmp.ge.s32.totalorder %s30, 4
      %s32 = scalar_select %p31, 0, %s30
      %s33 = sadd.s32 1, %s24
      %s34 = scalar_select %p31, %s33, %s24
      %p35 = scmp.ge.s32.totalorder %s34, 2
      %s36 = scalar_select %p35, 0, %s34
      %s37 = ssub.s32 %s24, %s36
      %s38 = ssub.s32 %s25, %s32
      %s39 = sor.u32 %s37, %s38
      %p40 = scmp.eq.s32.totalorder %s39, 0
      %s42 = sadd.s32 %s41, 1
      %s43 = scalar_select %p40, %s41, %s42
      %p46 = pneg %p40
      %p47 = scmp.eq.s32.totalorder %s17, 7
      %p48 = por %p46, %p47
      %p49 = scmp.ne.s32.totalorder %s41, %s44
      %p50 = scmp.eq.s32.totalorder %s17, 0
      %p51 = por %p49, %p50
      %p52 = scmp.ne.s32.totalorder %s41, %s44
      %p53 = scmp.eq.s32.totalorder %s22, 7
      %p54 = por %p52, %p53
      %p55 = scmp.ne.s32.totalorder %s44, %s45
      %p56 = scmp.eq.s32.totalorder %s22, 0
      %p57 = por %p55, %p56
      %p58 = scmp.ne.s32.totalorder %s44, %s45
      %p59 = scmp.eq.s32.totalorder %s23, 7
      %p60 = por %p58, %p59
      %p62 = scmp.ne.s32.totalorder %s45, %s61
      %p63 = scmp.eq.s32.totalorder %s23, 0
      %p64 = por %p62, %p63
      %s66 = sadd.s32 %s65, 1
      %p69 = scmp.eq.s32.totalorder %s17, 7
      %p70 = scmp.ne.s32.totalorder %s65, %s67
      %p71 = scmp.eq.s32.totalorder %s17, 0
      %p72 = por %p70, %p71
      %p73 = scmp.ne.s32.totalorder %s65, %s67
      %p74 = scmp.eq.s32.totalorder %s22, 7
      %p75 = por %p73, %p74
      %p76 = scmp.ne.s32.totalorder %s67, %s68
      %p77 = scmp.eq.s32.totalorder %s22, 0
      %p78 = por %p76, %p77
      %p79 = scmp.ne.s32.totalorder %s67, %s68
      %p80 = scmp.eq.s32.totalorder %s23, 7
      %p81 = por %p79, %p80
      %p83 = scmp.ne.s32.totalorder %s68, %s82
      %p84 = scmp.eq.s32.totalorder %s23, 0
      %p85 = por %p83, %p84
      %s87 = sadd.s32 %s86, 1
      %p90 = scmp.eq.s32.totalorder %s17, 7
      %p91 = scmp.ne.s32.totalorder %s86, %s88
      %p92 = scmp.eq.s32.totalorder %s17, 0
      %p93 = por %p91, %p92
      %p94 = scmp.ne.s32.totalorder %s86, %s88
      %p95 = scmp.eq.s32.totalorder %s22, 7
      %p96 = por %p94, %p95
      %p97 = scmp.ne.s32.totalorder %s88, %s89
      %p98 = scmp.eq.s32.totalorder %s22, 0
      %p99 = por %p97, %p98
      %p100 = scmp.ne.s32.totalorder %s88, %s89
      %p101 = scmp.eq.s32.totalorder %s23, 7
      %p102 = por %p100, %p101
      %p104 = scmp.ne.s32.totalorder %s89, %s103
      %p105 = scmp.eq.s32.totalorder %s23, 0
      %p106 = por %p104, %p105
      %s107 = ssub.s32 %s24, %s36
      %s108 = ssub.s32 %s25, %s32
      %s109 = sor.u32 %s107, %s108
      %p110 = scmp.eq.s32.totalorder %s109, 0
      %s112 = sadd.s32 %s111, 1
      %s113 = scalar_select %p110, %s111, %s112
      %p116 = pneg %p110
      %p117 = scmp.eq.s32.totalorder %s17, 7
      %p118 = por %p116, %p117
      %p119 = scmp.ne.s32.totalorder %s111, %s114
      %p120 = scmp.eq.s32.totalorder %s17, 0
      %p121 = por %p119, %p120
      %p122 = scmp.ne.s32.totalorder %s111, %s114
      %p123 = scmp.eq.s32.totalorder %s22, 7
      %p124 = por %p122, %p123
      %p125 = scmp.ne.s32.totalorder %s114, %s115
      %p126 = scmp.eq.s32.totalorder %s22, 0
      %p127 = por %p125, %p126
      %p128 = scmp.ne.s32.totalorder %s114, %s115
      %p129 = scmp.eq.s32.totalorder %s23, 7
      %p130 = por %p128, %p129
      %p132 = scmp.ne.s32.totalorder %s115, %s131
      %p133 = scmp.eq.s32.totalorder %s23, 0
      %p134 = por %p132, %p133
      %p135 = scmp.le.s32.totalorder 1, %s17
      %p136 = scmp.lt.s32.totalorder %s17, 9
      %p137 = pnand %p135, %p136
      %p138 = pneg %p137
      // Predicated region
      $region9: #{tpu_custom_call.1} parent=5 // pred_check
        _
      $region10: #{tpu_custom_call.1} parent=5 // pred_check_branch
        %140 = sbr.rel (%p137) target = $region12
      $region11: #{tpu_custom_call.1} parent=5 // pred_region
        %s141 = ssub.s32 %s17, 1
        // Predicated region
        $region13: #{tpu_custom_call.1} parent=11 // pred_check
          %p142 = pneg %p78
        $region14: #{tpu_custom_call.1} parent=11 // pred_check_branch
          %144 = sbr.rel (%p142) target = $region16
        $region15: #{tpu_custom_call.1} parent=11 // pred_region
          %s146 = ssub.s32 16, 16
          %147 = vsyncadd [#allocation5], %s146
          %s149 = sshll.u32 %s1, 4
          %s150 = int_to_ptr.vmem [resolvable:$true] %s149
          %152 = dma.vmem_to_smem %s150, 16, [#allocation6], [#allocation5]
        $region16: #{tpu_custom_call.1} parent=11 // pred_fallthru
          _
        // Predicated region
        $region17: #{tpu_custom_call.1} parent=11 // pred_check
          %p153 = pneg %p99
        $region18: #{tpu_custom_call.1} parent=11 // pred_check_branch
          %155 = sbr.rel (%p153) target = $region20
        $region19: #{tpu_custom_call.1} parent=11 // pred_region
          %s157 = ssub.s32 16, 16
          %158 = vsyncadd [#allocation8], %s157
          %s160 = sshll.u32 %s2, 4
          %s161 = int_to_ptr.vmem [resolvable:$true] %s160
          %163 = dma.vmem_to_smem %s161, 16, [#allocation7], [#allocation8]
        $region20: #{tpu_custom_call.1} parent=11 // pred_fallthru
          _
      $region12: #{tpu_custom_call.1} parent=5 // pred_fallthru
        _
      %p164 = scmp.lt.s32.totalorder %s17, 8
      // Predicated region
      $region21: #{tpu_custom_call.1} parent=5 // pred_check
        %p165 = pneg %p164
      $region22: #{tpu_custom_call.1} parent=5 // pred_check_branch
        %167 = sbr.rel (%p165) target = $region24
      $region23: #{tpu_custom_call.1} parent=5 // pred_region
        // Predicated region
        $region25: #{tpu_custom_call.1} parent=23 // pred_check
          %p168 = pneg %p51
        $region26: #{tpu_custom_call.1} parent=23 // pred_check_branch
          %170 = sbr.rel (%p168) target = $region28
        $region27: #{tpu_custom_call.1} parent=23 // pred_region
          %s171 = sand.u32 %s41, 1
          %s172 = scalar_lea.sflag [#allocation3], %s171
          %s173 = sand.u32 %s41, 1
          %s174 = smul.addr %s173, 16
          %s175 = scalar_lea.vmem [#allocation2], %s174
          %s177 = ssub.s32 256, 256
          %178 = vsyncadd %s172, %s177
          %s179 = smul.addr %s25, 2
          %s180 = smul.addr %s24, 8
          %s181 = sadd.s32 %s179, %s180
          %s182 = smul.addr %s181, 128
          %s183 = scalar_lea.hbm %s0, %s182
          %s184 = sshll.u32 %s175, 4
          %s185 = int_to_ptr.vmem [resolvable:$true] %s184
          %190 = dma.hbm_to_vmem [thread:$0]  %s183, 256, %s185, %s172, 128, 128, 8
        $region28: #{tpu_custom_call.1} parent=23 // pred_fallthru
          _
      $region24: #{tpu_custom_call.1} parent=5 // pred_fallthru
        _
      %p191 = scmp.le.s32.totalorder 1, %s17
      %p192 = scmp.lt.s32.totalorder %s17, 9
      %p193 = pnand %p191, %p192
      %p194 = pneg %p193
      // Predicated region
      $region29: #{tpu_custom_call.1} parent=5 // pred_check
        _
      $region30: #{tpu_custom_call.1} parent=5 // pred_check_branch
        %196 = sbr.rel (%p193) target = $region32
      $region31: #{tpu_custom_call.1} parent=5 // pred_region
        %s197 = ssub.s32 %s17, 1
        %s198 = sand.u32 %s44, 1
        %s199 = scalar_lea.sflag [#allocation3], %s198
        %s200 = sand.u32 %s44, 1
        %s201 = smul.addr %s200, 16
        %s202 = scalar_lea.vmem [#allocation2], %s201
        // Predicated region
        $region33: #{tpu_custom_call.1} parent=31 // pred_check
          %p203 = pneg %p57
        $region34: #{tpu_custom_call.1} parent=31 // pred_check_branch
          %205 = sbr.rel (%p203) target = $region36
        $region35: #{tpu_custom_call.1} parent=31 // pred_region
          %206 = dma.done %s199, 256
        $region36: #{tpu_custom_call.1} parent=31 // pred_fallthru
          _
        // Predicated region
        $region37: #{tpu_custom_call.1} parent=31 // pred_check
          %p207 = pneg %p78
        $region38: #{tpu_custom_call.1} parent=31 // pred_check_branch
          %209 = sbr.rel (%p207) target = $region40
        $region39: #{tpu_custom_call.1} parent=31 // pred_region
          %210 = dma.done [#allocation5], 16
        $region40: #{tpu_custom_call.1} parent=31 // pred_fallthru
          _
        // Predicated region
        $region41: #{tpu_custom_call.1} parent=31 // pred_check
          %p211 = pneg %p99
        $region42: #{tpu_custom_call.1} parent=31 // pred_check_branch
          %213 = sbr.rel (%p211) target = $region44
        $region43: #{tpu_custom_call.1} parent=31 // pred_region
          %214 = dma.done [#allocation8], 16
        $region44: #{tpu_custom_call.1} parent=31 // pred_fallthru
          _
        %215 = sfence
        %s216 = sand.u32 %s44, 1
        %s217 = scalar_lea.sflag [#allocation3], %s216
        %s218 = sand.u32 %s44, 1
        %s219 = smul.addr %s218, 16
        %s220 = scalar_lea.vmem [#allocation2], %s219
        %p221 = pneg %p57
        %p222 = pneg %p54
        %p223 = pneg %p78
        %p224 = pneg %p75
        %p225 = pneg %p99
        %p226 = pneg %p96
        %p227 = pneg %p127
        %p228 = pneg %p124
        %s229 = sand.u32 %s114, 1
        %s230 = scalar_lea.sflag [#allocation4], %s229
        %s231 = sand.u32 %s114, 1
        %s232 = smul.addr %s231, 16
        %s233 = scalar_lea.vmem [#allocation9], %s232
        %v234 = vld [vmem:[%s202] sm:$0xff]
        %v235 = vld [vmem:[%s202 + $0x8] sm:$0xff]
        %v236 = vlaneseq
        %v237 = vshrl.u32 %v236, 7
        %v238 = vadd.s32 %v237, 8
        %v239 = vlaneseq
        %v240 = vand.u32 %v239, 127
        %vm241 = vcmp.ge.s32.totalorder %v237, 1
        %vm242 = vcmp.ge.s32.totalorder %v238, 1
        %vm243 = vcmp.le.s32.totalorder %v237, 14
        %vm244 = vcmp.le.s32.totalorder %v238, 14
        %vm245 = vcmp.ge.s32.totalorder %v240, 1
        %vm246 = vcmp.le.s32.totalorder %v240, 14
        %s247 = smul.u32 %s27, 9
        %s248 = sld [smem:[#allocation6 + %s247]]
        %v249 = vrot.slane %v234, 7
        %v250 = vrot.slane %v235, 7
        %vm251 = vcmp.lt.s32.totalorder %v237, 1
        %v252 = vsel %vm251, %v249, %v250
        %v253 = vsel %vm251, %v250, %v249
        %vm254 = vcmask 1047680
        %255 = vrot.lane.b32.xlu0 %v253, 16
        %v256 = vpop.permute.xlu0 %255
        %v257 = vsel %vm254, %v256, %v253
        %258 = vrot.lane.b32.xlu0 %v252, 16
        %v259 = vpop.permute.xlu0 %258
        %v260 = vsel %vm254, %v259, %v252
        %261 = vrot.lane.b32.xlu0 %v257, 16
        %v262 = vpop.permute.xlu0 %261
        %263 = vrot.lane.b32.xlu0 %v260, 16
        %v264 = vpop.permute.xlu0 %263
        %v265 = vsel %vm254, %v262, %v253
        %v266 = vsel %vm254, %v264, %v252
        %vm267 = vmand %vm241, %vm245
        %vm268 = vmand %vm242, %vm245
        %271 = vrot.lane.b32.xlu0 %v265, 113
        %v272 = vpop.permute.xlu0 %271
        %273 = vrot.lane.b32.xlu0 %v266, 113
        %v274 = vpop.permute.xlu0 %273
        %v277 = vsel %vm267, %v272, 0.0
        %v278 = vsel %vm268, %v274, 0.0
        %v279 = vstv %s248
        %v280 = vmul.f32 %v277, %v279
        %v281 = vmul.f32 %v278, %v279
        %v282 = vadd.f32 %v280, 0.0
        %v283 = vadd.f32 %v281, 0.0
        %s284 = sadd.s32 %s247, 1
        %s285 = sld [smem:[#allocation6 + %s284]]
        %v286 = vsel %vm241, %v253, 0.0
        %v287 = vsel %vm242, %v252, 0.0
        %v288 = vstv %s285
        %v289 = vmul.f32 %v286, %v288
        %v290 = vmul.f32 %v287, %v288
        %v291 = vadd.f32 %v282, %v289
        %v292 = vadd.f32 %v283, %v290
        %s293 = sadd.s32 %s247, 2
        %s294 = sld [smem:[#allocation6 + %s293]]
        %vm295 = vmand %vm241, %vm246
        %vm296 = vmand %vm242, %vm246
        %297 = vrot.lane.b32.xlu0 %v265, 127
        %v298 = vpop.permute.xlu0 %297
        %299 = vrot.lane.b32.xlu0 %v266, 127
        %v300 = vpop.permute.xlu0 %299
        %v303 = vsel %vm295, %v298, 0.0
        %v304 = vsel %vm296, %v300, 0.0
        %v305 = vstv %s294
        %v306 = vmul.f32 %v303, %v305
        %v307 = vmul.f32 %v304, %v305
        %v308 = vadd.f32 %v291, %v306
        %v309 = vadd.f32 %v292, %v307
        %s310 = sadd.s32 %s247, 3
        %s311 = sld [smem:[#allocation6 + %s310]]
        %312 = vrot.lane.b32.xlu0 %v234, 16
        %v313 = vpop.permute.xlu0 %312
        %v314 = vsel %vm254, %v313, %v234
        %315 = vrot.lane.b32.xlu0 %v235, 16
        %v316 = vpop.permute.xlu0 %315
        %v317 = vsel %vm254, %v316, %v235
        %318 = vrot.lane.b32.xlu0 %v314, 16
        %v319 = vpop.permute.xlu0 %318
        %320 = vrot.lane.b32.xlu0 %v317, 16
        %v321 = vpop.permute.xlu0 %320
        %v322 = vsel %vm254, %v319, %v234
        %v323 = vsel %vm254, %v321, %v235
        %326 = vrot.lane.b32.xlu0 %v322, 113
        %v327 = vpop.permute.xlu0 %326
        %328 = vrot.lane.b32.xlu0 %v323, 113
        %v329 = vpop.permute.xlu0 %328
        %v332 = vsel %vm245, %v327, 0.0
        %v333 = vsel %vm245, %v329, 0.0
        %v334 = vstv %s311
        %v335 = vmul.f32 %v332, %v334
        %v336 = vmul.f32 %v333, %v334
        %v337 = vadd.f32 %v308, %v335
        %v338 = vadd.f32 %v309, %v336
        %s339 = sadd.s32 %s247, 4
        %s340 = sld [smem:[#allocation6 + %s339]]
        %v341 = vstv %s340
        %v342 = vmul.f32 %v234, %v341
        %v343 = vmul.f32 %v235, %v341
        %v344 = vadd.f32 %v337, %v342
        %v345 = vadd.f32 %v338, %v343
        %s346 = sadd.s32 %s247, 5
        %s347 = sld [smem:[#allocation6 + %s346]]
        %348 = vrot.lane.b32.xlu0 %v322, 127
        %v349 = vpop.permute.xlu0 %348
        %350 = vrot.lane.b32.xlu0 %v323, 127
        %v351 = vpop.permute.xlu0 %350
        %v354 = vsel %vm246, %v349, 0.0
        %v355 = vsel %vm246, %v351, 0.0
        %v356 = vstv %s347
        %v357 = vmul.f32 %v354, %v356
        %v358 = vmul.f32 %v355, %v356
        %v359 = vadd.f32 %v344, %v357
        %v360 = vadd.f32 %v345, %v358
        %s361 = sadd.s32 %s247, 6
        %s362 = sld [smem:[#allocation6 + %s361]]
        %v363 = vrot.slane %v234, 1
        %v364 = vrot.slane %v235, 1
        %vm365 = vcmp.lt.s32.totalorder %v237, 7
        %v366 = vsel %vm365, %v363, %v364
        %v367 = vsel %vm365, %v364, %v363
        %368 = vrot.lane.b32.xlu0 %v366, 16
        %v369 = vpop.permute.xlu0 %368
        %v370 = vsel %vm254, %v369, %v366
        %371 = vrot.lane.b32.xlu0 %v367, 16
        %v372 = vpop.permute.xlu0 %371
        %v373 = vsel %vm254, %v372, %v367
        %374 = vrot.lane.b32.xlu0 %v370, 16
        %v375 = vpop.permute.xlu0 %374
        %376 = vrot.lane.b32.xlu0 %v373, 16
        %v377 = vpop.permute.xlu0 %376
        %v378 = vsel %vm254, %v375, %v366
        %v379 = vsel %vm254, %v377, %v367
        %vm380 = vmand %vm243, %vm245
        %vm381 = vmand %vm244, %vm245
        %384 = vrot.lane.b32.xlu0 %v378, 113
        %v385 = vpop.permute.xlu0 %384
        %386 = vrot.lane.b32.xlu0 %v379, 113
        %v387 = vpop.permute.xlu0 %386
        %v390 = vsel %vm380, %v385, 0.0
        %v391 = vsel %vm381, %v387, 0.0
        %v392 = vstv %s362
        %v393 = vmul.f32 %v390, %v392
        %v394 = vmul.f32 %v391, %v392
        %v395 = vadd.f32 %v359, %v393
        %v396 = vadd.f32 %v360, %v394
        %s397 = sadd.s32 %s247, 7
        %s398 = sld [smem:[#allocation6 + %s397]]
        %v399 = vsel %vm243, %v366, 0.0
        %v400 = vsel %vm244, %v367, 0.0
        %v401 = vstv %s398
        %v402 = vmul.f32 %v399, %v401
        %v403 = vmul.f32 %v400, %v401
        %v404 = vadd.f32 %v395, %v402
        %v405 = vadd.f32 %v396, %v403
        %s406 = sadd.s32 %s247, 8
        %s407 = sld [smem:[#allocation6 + %s406]]
        %vm408 = vmand %vm243, %vm246
        %vm409 = vmand %vm244, %vm246
        %410 = vrot.lane.b32.xlu0 %v378, 127
        %v411 = vpop.permute.xlu0 %410
        %412 = vrot.lane.b32.xlu0 %v379, 127
        %v413 = vpop.permute.xlu0 %412
        %v416 = vsel %vm408, %v411, 0.0
        %v417 = vsel %vm409, %v413, 0.0
        %v418 = vstv %s407
        %v419 = vmul.f32 %v416, %v418
        %v420 = vmul.f32 %v417, %v418
        %v421 = vadd.f32 %v404, %v419
        %v422 = vadd.f32 %v405, %v420
        %s423 = sld [smem:[#allocation7 + %s27]]
        %v424 = vstv %s423
        %v425 = vadd.f32 %v421, %v424
        %v426 = vadd.f32 %v422, %v424
        %v427 = vxor.u32 %v425, 2147483648
        %v428 = vxor.u32 %v426, 2147483648
        %v429 = vmul.f32 %v427, 1.442695
        %v430 = vpow.pop %v429
        %v431 = vmul.f32 %v428, 1.442695
        %v432 = vpow.pop %v431
        %v433 = vadd.f32 %v430, 1.0
        %v434 = vadd.f32 %v432, 1.0
        %v435 = vrcp.pop %v433
        %v436 = vmul.f32 1.0, %v435
        %v437 = vrcp.pop %v434
        %v438 = vmul.f32 1.0, %v437
        %v439 = vmul.f32 %v234, %v436
        %v440 = vmul.f32 %v235, %v438
        %vm441 = vcmask 130048
        %442 = vst.msk [vmem:[%s233] sm:$0xff] %vm441, %v439
        %443 = vst.msk [vmem:[%s233 + $0x8] sm:$0xff] %vm441, %v440
        %s444 = sand.u32 %s114, 1
        %s445 = scalar_lea.sflag [#allocation4], %s444
        %s446 = sand.u32 %s114, 1
        %s447 = smul.addr %s446, 16
        %s448 = scalar_lea.vmem [#allocation9], %s447
        // Predicated region
        $region45: #{tpu_custom_call.1} parent=31 // pred_check
          %p449 = pneg %p124
        $region46: #{tpu_custom_call.1} parent=31 // pred_check_branch
          %451 = sbr.rel (%p449) target = $region48
        $region47: #{tpu_custom_call.1} parent=31 // pred_region
          %s453 = ssub.s32 256, 256
          %454 = vsyncadd %s445, %s453
          %s455 = smul.addr %s27, 2
          %s456 = smul.addr %s26, 8
          %s457 = sadd.s32 %s455, %s456
          %s458 = smul.addr %s457, 128
          %s459 = scalar_lea.hbm %s3, %s458
          %s460 = sshll.u32 %s448, 4
          %s461 = int_to_ptr.vmem [resolvable:$true] %s460
          %466 = dma.vmem_to_hbm [thread:$0]  %s461, 256, %s459, %s445, 128, 128, 8
        $region48: #{tpu_custom_call.1} parent=31 // pred_fallthru
          _
      $region32: #{tpu_custom_call.1} parent=5 // pred_fallthru
        _
      %p467 = scmp.le.s32.totalorder 2, %s17
      // Predicated region
      $region49: #{tpu_custom_call.1} parent=5 // pred_check
        %p468 = pneg %p467
      $region50: #{tpu_custom_call.1} parent=5 // pred_check_branch
        %470 = sbr.rel (%p468) target = $region52
      $region51: #{tpu_custom_call.1} parent=5 // pred_region
        %s471 = ssub.s32 %s17, 2
        // Predicated region
        $region53: #{tpu_custom_call.1} parent=51 // pred_check
          %p472 = pneg %p130
        $region54: #{tpu_custom_call.1} parent=51 // pred_check_branch
          %474 = sbr.rel (%p472) target = $region56
        $region55: #{tpu_custom_call.1} parent=51 // pred_region
          %s475 = sand.u32 %s115, 1
          %s476 = scalar_lea.sflag [#allocation4], %s475
          %s477 = sand.u32 %s115, 1
          %s478 = smul.addr %s477, 16
          %s479 = scalar_lea.vmem [#allocation9], %s478
          %480 = dma.done %s476, 256
        $region56: #{tpu_custom_call.1} parent=51 // pred_fallthru
          _
      $region52: #{tpu_custom_call.1} parent=5 // pred_fallthru
        _
    $region6: #{tpu_custom_call.1} parent=1 // loop_footer
      %s21 = sadd.s32 1, %s17
    $region7: #{tpu_custom_call.1} parent=1 // loop_footer_branch
      %16 = sbr.rel target = $region3
    $region8: #{tpu_custom_call.1} parent=1 // loop_exit
      _
    %481 = vsyncpa [#allocation3], 1
    %s482 = scalar_lea.sflag [#allocation3], 1
    %483 = vsyncpa %s482, 1
    %484 = vsyncpa [#allocation4], 1
    %s485 = scalar_lea.sflag [#allocation4], 1
    %486 = vsyncpa %s485, 1
    %487 = vsyncpa [#allocation5], 1
    %s488 = scalar_lea.sflag [#allocation5], 1
    %489 = vsyncpa %s488, 1
    %490 = vsyncpa [#allocation8], 1

</llo_original>
